<compile_context>
chip_gen: v7x
topology: tpu7x:2x2x1
jax: 0.10.0
libtpu: 0.0.40
codegen_flags: <defaults>
</compile_context>

<pallas_src>
import functools

import jax
import jax.numpy as jnp
from jax.experimental import pallas as pl
from jax.experimental.pallas import tpu as pltpu

LANE = 128


# ---------------------------------------------------------------------------
# Pass 1: fused direct conv (+bias) + BN batch-statistics accumulation
# ---------------------------------------------------------------------------
def _conv_bn_stats_kernel(*refs, KH, KW, OW, stride):
    # refs = (x_row_ref[0..KH-1], w_ref, b_ref, o_ref, sum_ref, ssq_ref)
    x_refs = refs[:KH]
    w_ref, b_ref = refs[KH], refs[KH + 1]
    o_ref, sum_ref, ssq_ref = refs[KH + 2], refs[KH + 3], refs[KH + 4]
    cpad = b_ref.shape[-1]

    first_step = jnp.logical_and(pl.program_id(0) == 0, pl.program_id(1) == 0)

    @pl.when(first_step)
    def _():
        sum_ref[...] = jnp.zeros_like(sum_ref)
        ssq_ref[...] = jnp.zeros_like(ssq_ref)

    # One output row per grid step: acc[ow, c] = sum_{kh,kw,ci} x * w  (+ bias)
    acc = jnp.zeros((OW, cpad), jnp.float32)
    for kh in range(KH):
        for kw in range(KW):
            if stride == 1:
                win = x_refs[kh][0, 0, kw:kw + OW, :]          # (OW, Cin) bf16
            else:
                win = x_refs[kh][0, 0, pl.ds(kw, OW, stride=stride), :]
            acc = acc + jnp.dot(win, w_ref[kh * KW + kw],
                                preferred_element_type=jnp.float32)
    acc = acc + b_ref[...]

    o_ref[0, 0] = acc
    sum_ref[...] += jnp.sum(acc, axis=0, keepdims=True)
    ssq_ref[...] += jnp.sum(acc * acc, axis=0, keepdims=True)


# ---------------------------------------------------------------------------
# Pass 2: y = x*scale + shift ; LeakyReLU   (pure streaming, lane-dense tiles)
# ---------------------------------------------------------------------------
def _bn_apply_kernel(x_ref, scale_ref, shift_ref, o_ref, *, neg_slope):
    y = x_ref[...] * scale_ref[...] + shift_ref[...]
    o_ref[...] = jnp.where(y > 0, y, neg_slope * y)


# ---------------------------------------------------------------------------
# Wrapper
# ---------------------------------------------------------------------------
def cnn_block(x_nchw, weight, bias, gamma, beta, *, stride, padding,
              eps=1e-5, neg_slope=0.1):
    """Conv2d -> BatchNorm2d (batch statistics) -> LeakyReLU(0.1).

    x_nchw : (N, Cin, H, W)      weight : (Cout, Cin, KH, KW)   (PyTorch layouts)
    returns (N, Cout, OH, OW)
    """
    N, Cin, H, W = x_nchw.shape
    Cout, _, KH, KW = weight.shape
    OH = (H + 2 * padding - KH) // stride + 1
    OW = (W + 2 * padding - KW) // stride + 1
    HP, WP = H + 2 * padding, W + 2 * padding
    M = N * OH * OW
    Cpad = ((Cout + LANE - 1) // LANE) * LANE

    # NHWC, spatial padding, bf16 for the MXU.
    x_nhwc = jnp.transpose(x_nchw, (0, 2, 3, 1))
    xp = jnp.pad(x_nhwc, ((0, 0), (padding, padding),
                          (padding, padding), (0, 0))).astype(jnp.bfloat16)

    # (Cout, Cin, KH, KW) -> (KH*KW, Cin, Cpad), channel-padded with zeros, bf16.
    w = jnp.transpose(weight, (2, 3, 1, 0)).reshape(KH * KW, Cin, Cout)
    w = jnp.pad(w, ((0, 0), (0, 0), (0, Cpad - Cout))).astype(jnp.bfloat16)
    b_row = jnp.pad(bias.astype(jnp.float32), (0, Cpad - Cout)).reshape(1, Cpad)
    g_pad = jnp.pad(gamma.astype(jnp.float32), (0, Cpad - Cout))
    be_pad = jnp.pad(beta.astype(jnp.float32), (0, Cpad - Cout))

    # ---- pass 1: fused conv + BN statistics --------------------------------
    # KH copies of the input, each BlockSpec selecting the shifted input row
    # oh*stride + kh for output row oh (no im2col in HBM).
    x_specs = [
        pl.BlockSpec((1, 1, WP, Cin),
                     lambda n, oh, kh=kh: (n, oh * stride + kh, 0, 0))
        for kh in range(KH)
    ]
    conv_out, ch_sum, ch_ssq = pl.pallas_call(
        functools.partial(_conv_bn_stats_kernel, KH=KH, KW=KW, OW=OW,
                          stride=stride),
        grid=(N, OH),
        in_specs=x_specs + [
            pl.BlockSpec((KH * KW, Cin, Cpad), lambda n, oh: (0, 0, 0)),
            pl.BlockSpec((1, Cpad), lambda n, oh: (0, 0)),
        ],
        out_specs=(
            pl.BlockSpec((1, 1, OW, Cpad), lambda n, oh: (n, oh, 0, 0)),
            pl.BlockSpec((1, Cpad), lambda n, oh: (0, 0)),
            pl.BlockSpec((1, Cpad), lambda n, oh: (0, 0)),
        ),
        out_shape=(
            jax.ShapeDtypeStruct((N, OH, OW, Cpad), jnp.float32),
            jax.ShapeDtypeStruct((1, Cpad), jnp.float32),
            jax.ShapeDtypeStruct((1, Cpad), jnp.float32),
        ),
        compiler_params=pltpu.CompilerParams(
            dimension_semantics=("arbitrary", "arbitrary")),
    )(*([xp] * KH + [w, b_row]))

    # ---- tiny O(Cout) math: fold stats + affine into scale/shift -----------
    cnt = jnp.float32(M)
    mean = ch_sum[0] / cnt
    var = jnp.maximum(ch_ssq[0] / cnt - mean * mean, 0.0)   # biased var (PyTorch train)
    scale = g_pad * jax.lax.rsqrt(var + eps)
    shift = be_pad - mean * scale
    scale_row = scale.reshape(1, Cpad)
    shift_row = shift.reshape(1, Cpad)

    # ---- pass 2: normalize + affine + LeakyReLU -----------------------------
    conv_flat = conv_out.reshape(M, Cpad)
    TM = 512 if M >= 512 else ((M + 7) // 8) * 8
    Mp = ((M + TM - 1) // TM) * TM
    if Mp != M:
        conv_flat = jnp.pad(conv_flat, ((0, Mp - M), (0, 0)))

    out_flat = pl.pallas_call(
        functools.partial(_bn_apply_kernel, neg_slope=neg_slope),
        grid=(Mp // TM,),
        in_specs=[
            pl.BlockSpec((TM, Cpad), lambda i: (i, 0)),
            pl.BlockSpec((1, Cpad), lambda i: (0, 0)),
            pl.BlockSpec((1, Cpad), lambda i: (0, 0)),
        ],
        out_specs=pl.BlockSpec((TM, Cpad), lambda i: (i, 0)),
        out_shape=jax.ShapeDtypeStruct((Mp, Cpad), jnp.float32),
        compiler_params=pltpu.CompilerParams(
            dimension_semantics=("parallel",)),
    )(conv_flat, scale_row, shift_row)

    out = out_flat[:M].reshape(N, OH, OW, Cpad)[..., :Cout]
    return jnp.transpose(out, (0, 3, 1, 2))   # back to NCHW


# ---------------------------------------------------------------------------
# Pure-JAX reference (sanity check)
# ---------------------------------------------------------------------------
def _reference(x, w, b, gamma, beta, stride, padding, eps=1e-5, neg_slope=0.1):
    y = jax.lax.conv_general_dilated(
        x, w, window_strides=(stride, stride),
        padding=[(padding, padding), (padding, padding)],
        dimension_numbers=("NCHW", "OIHW", "NCHW"))
    y = y + b.reshape(1, -1, 1, 1)
    mean = jnp.mean(y, axis=(0, 2, 3), keepdims=True)
    var = jnp.mean((y - mean) ** 2, axis=(0, 2, 3), keepdims=True)
    y = (y - mean) / jnp.sqrt(var + eps)
    y = y * gamma.reshape(1, -1, 1, 1) + beta.reshape(1, -1, 1, 1)
    return jnp.where(y > 0, y, neg_slope * y)


if __name__ == "__main__":
    key = jax.random.PRNGKey(0)
    N, Cin, H, W = 2, 4, 16, 16
    Cout, Ksz, stride, padding = 8, 3, 1, 1

    k1, k2, k3 = jax.random.split(key, 3)
    x = jax.random.normal(k1, (N, Cin, H, W), dtype=jnp.float32)
    weight = jax.random.normal(k2, (Cout, Cin, Ksz, Ksz), dtype=jnp.float32) * 0.1
    bias = jax.random.normal(k3, (Cout,), dtype=jnp.float32) * 0.1
    gamma = jnp.ones((Cout,), dtype=jnp.float32)   # BatchNorm2d default init
    beta = jnp.zeros((Cout,), dtype=jnp.float32)

    out = cnn_block(x, weight, bias, gamma, beta, stride=stride, padding=padding)
    out = jax.block_until_ready(out)

    ref = _reference(x, weight, bias, gamma, beta, stride, padding)
    assert out.shape == ref.shape == (N, Cout, H, W)
    err = float(jnp.max(jnp.abs(out - ref)))
    assert err < 3e-2, f"mismatch vs reference: {err}"   # bf16 MXU feed, f32 accum

    print("KERNEL_OK")
</pallas_src>

<mosaic_0001>
module attributes {stable_mosaic.version = 11 : i64} {
  func.func @_conv_bn_stats_kernel(%arg0: i32, %arg1: i32, %arg2: memref<1x1x18x4xbf16, #tpu.memory_space<vmem>>, %arg3: memref<1x1x18x4xbf16, #tpu.memory_space<vmem>>, %arg4: memref<1x1x18x4xbf16, #tpu.memory_space<vmem>>, %arg5: memref<9x4x128xbf16, #tpu.memory_space<vmem>>, %arg6: memref<1x128xf32, #tpu.memory_space<vmem>>, %arg7: memref<1x1x16x128xf32, #tpu.memory_space<vmem>>, %arg8: memref<1x128xf32, #tpu.memory_space<vmem>>, %arg9: memref<1x128xf32, #tpu.memory_space<vmem>>) attributes {dimension_semantics = [#tpu.dimension_semantics<arbitrary>, #tpu.dimension_semantics<arbitrary>], iteration_bounds = array<i64: 2, 16>, scalar_prefetch = 0 : i64, scratch_operands = 0 : i64, tpu.core_type = #tpu.core_type<tc>, window_params = [{transform_indices = @transform_0, window_bounds = array<i64: 1, 1, 18, 4>}, {transform_indices = @transform_1, window_bounds = array<i64: 1, 1, 18, 4>}, {transform_indices = @transform_2, window_bounds = array<i64: 1, 1, 18, 4>}, {pipeline_mode = #tpu.pipeline_mode<synchronous>, transform_indices = @transform_3, window_bounds = array<i64: 9, 4, 128>}, {pipeline_mode = #tpu.pipeline_mode<synchronous>, transform_indices = @transform_4, window_bounds = array<i64: 1, 128>}, {transform_indices = @transform_5, window_bounds = array<i64: 1, 1, 16, 128>}, {pipeline_mode = #tpu.pipeline_mode<synchronous>, transform_indices = @transform_6, window_bounds = array<i64: 1, 128>}, {pipeline_mode = #tpu.pipeline_mode<synchronous>, transform_indices = @transform_7, window_bounds = array<i64: 1, 128>}]} {
    %c0_i32 = arith.constant 0 : i32
    %0 = arith.cmpi eq, %arg0, %c0_i32 : i32
    %c0_i32_0 = arith.constant 0 : i32
    %1 = arith.cmpi eq, %arg1, %c0_i32_0 : i32
    %2 = arith.andi %0, %1 : i1
    %3 = arith.extui %2 : i1 to i32
    %c0_i32_1 = arith.constant 0 : i32
    %4 = arith.cmpi ne, %3, %c0_i32_1 : i32
    scf.if %4 {
      %cst_81 = arith.constant 0.000000e+00 : f32
      %77 = vector.broadcast %cst_81 : f32 to vector<1x128xf32>
      %c0_82 = arith.constant 0 : index
      %c0_83 = arith.constant 0 : index
      %78 = vector.load %arg8[%c0_82, %c0_83] : memref<1x128xf32, #tpu.memory_space<vmem>>, vector<1x128xf32>
      tpu.vector_store %arg8[%c0_82, %c0_83], %77 {strides = array<i32>} : memref<1x128xf32, #tpu.memory_space<vmem>>, vector<1x128xf32>,
      %cst_84 = arith.constant 0.000000e+00 : f32
      %79 = vector.broadcast %cst_84 : f32 to vector<1x128xf32>
      %c0_85 = arith.constant 0 : index
      %c0_86 = arith.constant 0 : index
      %80 = vector.load %arg9[%c0_85, %c0_86] : memref<1x128xf32, #tpu.memory_space<vmem>>, vector<1x128xf32>
      tpu.vector_store %arg9[%c0_85, %c0_86], %79 {strides = array<i32>} : memref<1x128xf32, #tpu.memory_space<vmem>>, vector<1x128xf32>,
    } else {
    }
    %cst = arith.constant 0.000000e+00 : f32
    %5 = vector.broadcast %cst : f32 to vector<16x128xf32>
    %c0 = arith.constant 0 : index
    %c0_2 = arith.constant 0 : index
    %c0_3 = arith.constant 0 : index
    %c0_4 = arith.constant 0 : index
    %6 = vector.load %arg2[%c0, %c0_2, %c0_3, %c0_4] : memref<1x1x18x4xbf16, #tpu.memory_space<vmem>>, vector<1x1x16x4xbf16>
    %7 = vector.shape_cast %6 : vector<1x1x16x4xbf16> to vector<16x4xbf16>
    %c0_5 = arith.constant 0 : index
    %c0_6 = arith.constant 0 : index
    %c0_7 = arith.constant 0 : index
    %8 = vector.load %arg5[%c0_5, %c0_6, %c0_7] : memref<9x4x128xbf16, #tpu.memory_space<vmem>>, vector<1x4x128xbf16>
    %9 = vector.shape_cast %8 : vector<1x4x128xbf16> to vector<4x128xbf16>
    %cst_8 = arith.constant dense<0.000000e+00> : vector<16x128xf32>
    %10 = tpu.matmul %7, %9, %cst_8 {dimension_numbers = #tpu.dot_dimension_numbers<[1], [0], [0], [1], [0, 0, 1, 1], [], []>} : vector<16x4xbf16>, vector<4x128xbf16>, vector<16x128xf32> -> vector<16x128xf32>
    %11 = arith.addf %5, %10 : vector<16x128xf32>
    %c0_9 = arith.constant 0 : index
    %c0_10 = arith.constant 0 : index
    %c1 = arith.constant 1 : index
    %c0_11 = arith.constant 0 : index
    %12 = vector.load %arg2[%c0_9, %c0_10, %c1, %c0_11] : memref<1x1x18x4xbf16, #tpu.memory_space<vmem>>, vector<1x1x16x4xbf16>
    %13 = vector.shape_cast %12 : vector<1x1x16x4xbf16> to vector<16x4xbf16>
    %c1_12 = arith.constant 1 : index
    %c0_13 = arith.constant 0 : index
    %c0_14 = arith.constant 0 : index
    %14 = vector.load %arg5[%c1_12, %c0_13, %c0_14] : memref<9x4x128xbf16, #tpu.memory_space<vmem>>, vector<1x4x128xbf16>
    %15 = vector.shape_cast %14 : vector<1x4x128xbf16> to vector<4x128xbf16>
    %cst_15 = arith.constant dense<0.000000e+00> : vector<16x128xf32>
    %16 = tpu.matmul %13, %15, %cst_15 {dimension_numbers = #tpu.dot_dimension_numbers<[1], [0], [0], [1], [0, 0, 1, 1], [], []>} : vector<16x4xbf16>, vector<4x128xbf16>, vector<16x128xf32> -> vector<16x128xf32>
    %17 = arith.addf %11, %16 : vector<16x128xf32>
    %c0_16 = arith.constant 0 : index
    %c0_17 = arith.constant 0 : index
    %c2 = arith.constant 2 : index
    %c0_18 = arith.constant 0 : index
    %18 = vector.load %arg2[%c0_16, %c0_17, %c2, %c0_18] : memref<1x1x18x4xbf16, #tpu.memory_space<vmem>>, vector<1x1x16x4xbf16>
    %19 = vector.shape_cast %18 : vector<1x1x16x4xbf16> to vector<16x4xbf16>
    %c2_19 = arith.constant 2 : index
    %c0_20 = arith.constant 0 : index
    %c0_21 = arith.constant 0 : index
    %20 = vector.load %arg5[%c2_19, %c0_20, %c0_21] : memref<9x4x128xbf16, #tpu.memory_space<vmem>>, vector<1x4x128xbf16>
    %21 = vector.shape_cast %20 : vector<1x4x128xbf16> to vector<4x128xbf16>
    %cst_22 = arith.constant dense<0.000000e+00> : vector<16x128xf32>
    %22 = tpu.matmul %19, %21, %cst_22 {dimension_numbers = #tpu.dot_dimension_numbers<[1], [0], [0], [1], [0, 0, 1, 1], [], []>} : vector<16x4xbf16>, vector<4x128xbf16>, vector<16x128xf32> -> vector<16x128xf32>
    %23 = arith.addf %17, %22 : vector<16x128xf32>
    %c0_23 = arith.constant 0 : index
    %c0_24 = arith.constant 0 : index
    %c0_25 = arith.constant 0 : index
    %c0_26 = arith.constant 0 : index
    %24 = vector.load %arg3[%c0_23, %c0_24, %c0_25, %c0_26] : memref<1x1x18x4xbf16, #tpu.memory_space<vmem>>, vector<1x1x16x4xbf16>
    %25 = vector.shape_cast %24 : vector<1x1x16x4xbf16> to vector<16x4xbf16>
    %c3 = arith.constant 3 : index
    %c0_27 = arith.constant 0 : index
    %c0_28 = arith.constant 0 : index
    %26 = vector.load %arg5[%c3, %c0_27, %c0_28] : memref<9x4x128xbf16, #tpu.memory_space<vmem>>, vector<1x4x128xbf16>
    %27 = vector.shape_cast %26 : vector<1x4x128xbf16> to vector<4x128xbf16>
    %cst_29 = arith.constant dense<0.000000e+00> : vector<16x128xf32>
    %28 = tpu.matmul %25, %27, %cst_29 {dimension_numbers = #tpu.dot_dimension_numbers<[1], [0], [0], [1], [0, 0, 1, 1], [], []>} : vector<16x4xbf16>, vector<4x128xbf16>, vector<16x128xf32> -> vector<16x128xf32>
    %29 = arith.addf %23, %28 : vector<16x128xf32>
    %c0_30 = arith.constant 0 : index
    %c0_31 = arith.constant 0 : index
    %c1_32 = arith.constant 1 : index
    %c0_33 = arith.constant 0 : index
    %30 = vector.load %arg3[%c0_30, %c0_31, %c1_32, %c0_33] : memref<1x1x18x4xbf16, #tpu.memory_space<vmem>>, vector<1x1x16x4xbf16>
    %31 = vector.shape_cast %30 : vector<1x1x16x4xbf16> to vector<16x4xbf16>
    %c4 = arith.constant 4 : index
    %c0_34 = arith.constant 0 : index
    %c0_35 = arith.constant 0 : index
    %32 = vector.load %arg5[%c4, %c0_34, %c0_35] : memref<9x4x128xbf16, #tpu.memory_space<vmem>>, vector<1x4x128xbf16>
    %33 = vector.shape_cast %32 : vector<1x4x128xbf16> to vector<4x128xbf16>
    %cst_36 = arith.constant dense<0.000000e+00> : vector<16x128xf32>
    %34 = tpu.matmul %31, %33, %cst_36 {dimension_numbers = #tpu.dot_dimension_numbers<[1], [0], [0], [1], [0, 0, 1, 1], [], []>} : vector<16x4xbf16>, vector<4x128xbf16>, vector<16x128xf32> -> vector<16x128xf32>
    %35 = arith.addf %29, %34 : vector<16x128xf32>
    %c0_37 = arith.constant 0 : index
    %c0_38 = arith.constant 0 : index
    %c2_39 = arith.constant 2 : index
    %c0_40 = arith.constant 0 : index
    %36 = vector.load %arg3[%c0_37, %c0_38, %c2_39, %c0_40] : memref<1x1x18x4xbf16, #tpu.memory_space<vmem>>, vector<1x1x16x4xbf16>
    %37 = vector.shape_cast %36 : vector<1x1x16x4xbf16> to vector<16x4xbf16>
    %c5 = arith.constant 5 : index
    %c0_41 = arith.constant 0 : index
    %c0_42 = arith.constant 0 : index
    %38 = vector.load %arg5[%c5, %c0_41, %c0_42] : memref<9x4x128xbf16, #tpu.memory_space<vmem>>, vector<1x4x128xbf16>
    %39 = vector.shape_cast %38 : vector<1x4x128xbf16> to vector<4x128xbf16>
    %cst_43 = arith.constant dense<0.000000e+00> : vector<16x128xf32>
    %40 = tpu.matmul %37, %39, %cst_43 {dimension_numbers = #tpu.dot_dimension_numbers<[1], [0], [0], [1], [0, 0, 1, 1], [], []>} : vector<16x4xbf16>, vector<4x128xbf16>, vector<16x128xf32> -> vector<16x128xf32>
    %41 = arith.addf %35, %40 : vector<16x128xf32>
    %c0_44 = arith.constant 0 : index
    %c0_45 = arith.constant 0 : index
    %c0_46 = arith.constant 0 : index
    %c0_47 = arith.constant 0 : index
    %42 = vector.load %arg4[%c0_44, %c0_45, %c0_46, %c0_47] : memref<1x1x18x4xbf16, #tpu.memory_space<vmem>>, vector<1x1x16x4xbf16>
    %43 = vector.shape_cast %42 : vector<1x1x16x4xbf16> to vector<16x4xbf16>
    %c6 = arith.constant 6 : index
    %c0_48 = arith.constant 0 : index
    %c0_49 = arith.constant 0 : index
    %44 = vector.load %arg5[%c6, %c0_48, %c0_49] : memref<9x4x128xbf16, #tpu.memory_space<vmem>>, vector<1x4x128xbf16>
    %45 = vector.shape_cast %44 : vector<1x4x128xbf16> to vector<4x128xbf16>
    %cst_50 = arith.constant dense<0.000000e+00> : vector<16x128xf32>
    %46 = tpu.matmul %43, %45, %cst_50 {dimension_numbers = #tpu.dot_dimension_numbers<[1], [0], [0], [1], [0, 0, 1, 1], [], []>} : vector<16x4xbf16>, vector<4x128xbf16>, vector<16x128xf32> -> vector<16x128xf32>
    %47 = arith.addf %41, %46 : vector<16x128xf32>
    %c0_51 = arith.constant 0 : index
    %c0_52 = arith.constant 0 : index
    %c1_53 = arith.constant 1 : index
    %c0_54 = arith.constant 0 : index
    %48 = vector.load %arg4[%c0_51, %c0_52, %c1_53, %c0_54] : memref<1x1x18x4xbf16, #tpu.memory_space<vmem>>, vector<1x1x16x4xbf16>
    %49 = vector.shape_cast %48 : vector<1x1x16x4xbf16> to vector<16x4xbf16>
    %c7 = arith.constant 7 : index
    %c0_55 = arith.constant 0 : index
    %c0_56 = arith.constant 0 : index
    %50 = vector.load %arg5[%c7, %c0_55, %c0_56] : memref<9x4x128xbf16, #tpu.memory_space<vmem>>, vector<1x4x128xbf16>
    %51 = vector.shape_cast %50 : vector<1x4x128xbf16> to vector<4x128xbf16>
    %cst_57 = arith.constant dense<0.000000e+00> : vector<16x128xf32>
    %52 = tpu.matmul %49, %51, %cst_57 {dimension_numbers = #tpu.dot_dimension_numbers<[1], [0], [0], [1], [0, 0, 1, 1], [], []>} : vector<16x4xbf16>, vector<4x128xbf16>, vector<16x128xf32> -> vector<16x128xf32>
    %53 = arith.addf %47, %52 : vector<16x128xf32>
    %c0_58 = arith.constant 0 : index
    %c0_59 = arith.constant 0 : index
    %c2_60 = arith.constant 2 : index
    %c0_61 = arith.constant 0 : index
    %54 = vector.load %arg4[%c0_58, %c0_59, %c2_60, %c0_61] : memref<1x1x18x4xbf16, #tpu.memory_space<vmem>>, vector<1x1x16x4xbf16>
    %55 = vector.shape_cast %54 : vector<1x1x16x4xbf16> to vector<16x4xbf16>
    %c8 = arith.constant 8 : index
    %c0_62 = arith.constant 0 : index
    %c0_63 = arith.constant 0 : index
    %56 = vector.load %arg5[%c8, %c0_62, %c0_63] : memref<9x4x128xbf16, #tpu.memory_space<vmem>>, vector<1x4x128xbf16>
    %57 = vector.shape_cast %56 : vector<1x4x128xbf16> to vector<4x128xbf16>
    %cst_64 = arith.constant dense<0.000000e+00> : vector<16x128xf32>
    %58 = tpu.matmul %55, %57, %cst_64 {dimension_numbers = #tpu.dot_dimension_numbers<[1], [0], [0], [1], [0, 0, 1, 1], [], []>} : vector<16x4xbf16>, vector<4x128xbf16>, vector<16x128xf32> -> vector<16x128xf32>
    %59 = arith.addf %53, %58 : vector<16x128xf32>
    %c0_65 = arith.constant 0 : index
    %c0_66 = arith.constant 0 : index
    %60 = vector.load %arg6[%c0_65, %c0_66] : memref<1x128xf32, #tpu.memory_space<vmem>>, vector<1x128xf32>
    %61 = vector.broadcast %60 : vector<1x128xf32> to vector<16x128xf32>
    %62 = arith.addf %59, %61 : vector<16x128xf32>
    %c0_67 = arith.constant 0 : index
    %c0_68 = arith.constant 0 : index
    %c0_69 = arith.constant 0 : index
    %c0_70 = arith.constant 0 : index
    %63 = vector.load %arg7[%c0_67, %c0_68, %c0_69, %c0_70] : memref<1x1x16x128xf32, #tpu.memory_space<vmem>>, vector<1x1x16x128xf32>
    %64 = vector.shape_cast %63 : vector<1x1x16x128xf32> to vector<16x128xf32>
    %65 = vector.shape_cast %62 : vector<16x128xf32> to vector<1x1x16x128xf32>
    tpu.vector_store %arg7[%c0_67, %c0_68, %c0_69, %c0_70], %65 {strides = array<i32>} : memref<1x1x16x128xf32, #tpu.memory_space<vmem>>, vector<1x1x16x128xf32>,
    %c0_71 = arith.constant 0 : index
    %c0_72 = arith.constant 0 : index
    %66 = vector.load %arg8[%c0_71, %c0_72] : memref<1x128xf32, #tpu.memory_space<vmem>>, vector<1x128xf32>
    %cst_73 = arith.constant dense<0.000000e+00> : vector<128xf32>
    %67 = vector.multi_reduction <add>, %62, %cst_73 [0] : vector<16x128xf32> to vector<128xf32>
    %68 = vector.shape_cast %67 : vector<128xf32> to vector<1x128xf32>
    %69 = arith.addf %66, %68 : vector<1x128xf32>
    %c0_74 = arith.constant 0 : index
    %c0_75 = arith.constant 0 : index
    %70 = vector.load %arg8[%c0_74, %c0_75] : memref<1x128xf32, #tpu.memory_space<vmem>>, vector<1x128xf32>
    tpu.vector_store %arg8[%c0_74, %c0_75], %69 {strides = array<i32>} : memref<1x128xf32, #tpu.memory_space<vmem>>, vector<1x128xf32>,
    %c0_76 = arith.constant 0 : index
    %c0_77 = arith.constant 0 : index
    %71 = vector.load %arg9[%c0_76, %c0_77] : memref<1x128xf32, #tpu.memory_space<vmem>>, vector<1x128xf32>
    %72 = arith.mulf %62, %62 : vector<16x128xf32>
    %cst_78 = arith.constant dense<0.000000e+00> : vector<128xf32>
    %73 = vector.multi_reduction <add>, %72, %cst_78 [0] : vector<16x128xf32> to vector<128xf32>
    %74 = vector.shape_cast %73 : vector<128xf32> to vector<1x128xf32>
    %75 = arith.addf %71, %74 : vector<1x128xf32>
    %c0_79 = arith.constant 0 : index
    %c0_80 = arith.constant 0 : index
    %76 = vector.load %arg9[%c0_79, %c0_80] : memref<1x128xf32, #tpu.memory_space<vmem>>, vector<1x128xf32>
    tpu.vector_store %arg9[%c0_79, %c0_80], %75 {strides = array<i32>} : memref<1x128xf32, #tpu.memory_space<vmem>>, vector<1x128xf32>,
    return
  }
  func.func @transform_0(%arg0: i32, %arg1: i32) -> (i32, i32, i32, i32) {
    %c1_i32 = arith.constant 1 : i32
    %0 = arith.muli %arg1, %c1_i32 : i32
    %c0_i32 = arith.constant 0 : i32
    %1 = arith.addi %0, %c0_i32 : i32
    %c0_i32_0 = arith.constant 0 : i32
    %c0_i32_1 = arith.constant 0 : i32
    %c0_i32_2 = arith.constant 0 : i32
    return %arg0, %1, %c0_i32_0, %c0_i32_1 : i32, i32, i32, i32
  }
  func.func @transform_1(%arg0: i32, %arg1: i32) -> (i32, i32, i32, i32) {
    %c1_i32 = arith.constant 1 : i32
    %0 = arith.muli %arg1, %c1_i32 : i32
    %c1_i32_0 = arith.constant 1 : i32
    %1 = arith.addi %0, %c1_i32_0 : i32
    %c0_i32 = arith.constant 0 : i32
    %c0_i32_1 = arith.constant 0 : i32
    %c0_i32_2 = arith.constant 0 : i32
    return %arg0, %1, %c0_i32, %c0_i32_1 : i32, i32, i32, i32
  }
  func.func @transform_2(%arg0: i32, %arg1: i32) -> (i32, i32, i32, i32) {
    %c1_i32 = arith.constant 1 : i32
    %0 = arith.muli %arg1, %c1_i32 : i32
    %c2_i32 = arith.constant 2 : i32
    %1 = arith.addi %0, %c2_i32 : i32
    %c0_i32 = arith.constant 0 : i32
    %c0_i32_0 = arith.constant 0 : i32
    %c0_i32_1 = arith.constant 0 : i32
    return %arg0, %1, %c0_i32, %c0_i32_0 : i32, i32, i32, i32
  }
  func.func @transform_3(%arg0: i32, %arg1: i32) -> (i32, i32, i32) {
    %c0_i32 = arith.constant 0 : i32
    %c0_i32_0 = arith.constant 0 : i32
    %c0_i32_1 = arith.constant 0 : i32
    %c0_i32_2 = arith.constant 0 : i32
    return %c0_i32, %c0_i32_0, %c0_i32_1 : i32, i32, i32
  }
  func.func @transform_4(%arg0: i32, %arg1: i32) -> (i32, i32) {
    %c0_i32 = arith.constant 0 : i32
    %c0_i32_0 = arith.constant 0 : i32
    %c0_i32_1 = arith.constant 0 : i32
    return %c0_i32, %c0_i32_0 : i32, i32
  }
  func.func @transform_5(%arg0: i32, %arg1: i32) -> (i32, i32, i32, i32) {
    %c0_i32 = arith.constant 0 : i32
    %c0_i32_0 = arith.constant 0 : i32
    %c0_i32_1 = arith.constant 0 : i32
    return %arg0, %arg1, %c0_i32, %c0_i32_0 : i32, i32, i32, i32
  }
  func.func @transform_6(%arg0: i32, %arg1: i32) -> (i32, i32) {
    %c0_i32 = arith.constant 0 : i32
    %c0_i32_0 = arith.constant 0 : i32
    %c0_i32_1 = arith.constant 0 : i32
    return %c0_i32, %c0_i32_0 : i32, i32
  }
  func.func @transform_7(%arg0: i32, %arg1: i32) -> (i32, i32) {
    %c0_i32 = arith.constant 0 : i32
    %c0_i32_0 = arith.constant 0 : i32
    %c0_i32_1 = arith.constant 0 : i32
    return %c0_i32, %c0_i32_0 : i32, i32
  }
}

</mosaic_0001>

<llo_original>
// kernel: tpu_custom_call.1
$region0: #{tpu_custom_call.1}
  #allocation0 [shape = 'u32[]', space=smem, size = 0x4, offset = 0x4, fixed_abs, tag = 'smem constant byte address 0x4 - core index']
  #allocation1 [shape = 'u32[144,128]{1,0:T(1,128)}', space=vmem, size = 0x12000, scoped, tag = 'internal scratch']
  %s0 = inlined_call_operand.vmem [shape: bf16[2,18,18,4], index: 0, kind: input, shape index: {}]
  %s1 = inlined_call_operand.vmem [shape: bf16[2,18,18,4], index: 1, kind: input, shape index: {}]
  %s2 = inlined_call_operand.vmem [shape: bf16[2,18,18,4], index: 2, kind: input, shape index: {}]
  %s3 = inlined_call_operand.vmem [shape: bf16[9,4,128], index: 3, kind: input, shape index: {}]
  %s4 = inlined_call_operand.vmem [shape: f32[1,128], index: 4, kind: input, shape index: {}]
  %s5 = inlined_call_operand.hbm [shape: f32[2,16,16,128], index: 5, kind: output, shape index: {0}]
  %s6 = inlined_call_operand.hbm [shape: f32[1,128], index: 6, kind: output, shape index: {1}]
  %s7 = inlined_call_operand.hbm [shape: f32[1,128], index: 7, kind: output, shape index: {2}]
  %8 = xla_tuple %s5, %s6, %s7
  %s9 = sld [smem:[#allocation0]]
  $region73: #{tpu_custom_call.1} parent=0
    _
  %s11 = ssub.s32 1, %s9
  %s12 = scalar_select 0, %s11, %s9
  $region1: #{tpu_custom_call.1} parent=0
    #allocation2 [shape = 'u8[16384]{0}', space=vmem, size = 0x4000, scoped, tag = 'output window, operand 0']
    #allocation3 [shape = 's32[2]{0}', space=sflag, size = 0x8, scoped, tag = 'scoped memory for tpu_custom_call.1']
    #allocation4 [shape = 'u8[512]{0}', space=vmem, size = 0x400, scoped, tag = 'output window, operand 1, single buffered']
    #allocation5 [shape = 's32[1]{0}', space=sflag, size = 0x4, scoped, tag = 'scoped memory for tpu_custom_call.1']
    #allocation6 [shape = 'u8[512]{0}', space=vmem, size = 0x400, scoped, tag = 'output window, operand 2, single buffered']
    %13 = vsyncpa [#allocation3], 0
    %s14 = scalar_lea.sflag [#allocation3], 1
    %15 = vsyncpa %s14, 0
    %16 = vsyncpa [#allocation5], 0
    loop: start=0, step=1, limit=34
    $region2: #{tpu_custom_call.1} parent=1 // loop_pre_header
      _
    $region3: #{tpu_custom_call.1} parent=1 // loop_header
      %s18 = sphi 0, %s22
      %p19 = scmp.ge.s32.totalorder %s18, 34
      %s25 = sphi 0, %s37
      %s26 = sphi 0, %s33
      %s27 = sphi 0, %s25
      %s28 = sphi 0, %s26
      %s29 = sphi 0, %s27
      %s30 = sphi 0, %s28
      %s42 = sphi 0, %s44
      %s45 = sphi 0, %s42
      %s46 = sphi 0, %s45
      %s62 = sphi 0, %s46
      %s72 = sphi 0, %s74
      %s75 = sphi 0, %s72
      %s76 = sphi 0, %s75
      %s92 = sphi 0, %s76
      %s102 = sphi 0, %s104
      %s105 = sphi 0, %s102
      %s106 = sphi 0, %s105
      %s122 = sphi 0, %s106
      %s126 = sphi 0, %s126
      %s128 = sphi 0, %s126
      %s129 = sphi 0, %s128
      %s143 = sphi 0, %s129
      %s147 = sphi 0, %s147
      %s149 = sphi 0, %s147
      %s150 = sphi 0, %s149
      %s164 = sphi 0, %s150
      %s172 = sphi 0, %s174
      %s175 = sphi 0, %s172
      %s176 = sphi 0, %s175
      %s192 = sphi 0, %s176
      %s196 = sphi 0, %s196
      %s198 = sphi 0, %s196
      %s199 = sphi 0, %s198
      %s213 = sphi 0, %s199
      %s217 = sphi 0, %s217
      %s219 = sphi 0, %s217
      %s220 = sphi 0, %s219
      %s234 = sphi 0, %s220
    $region4: #{tpu_custom_call.1} parent=1 // loop_header_branch
      %21 = sbr.rel (%p19) target = $region8
    $region5: #{tpu_custom_call.1} parent=1 // loop_body
      %s23 = ssub.s32 %s18, 1
      %s24 = ssub.s32 %s18, 2
      %s31 = sadd.s32 1, %s26
      %p32 = scmp.ge.s32.totalorder %s31, 16
      %s33 = scalar_select %p32, 0, %s31
      %s34 = sadd.s32 1, %s25
      %s35 = scalar_select %p32, %s34, %s25
      %p36 = scmp.ge.s32.totalorder %s35, 2
      %s37 = scalar_select %p36, 0, %s35
      %s38 = ssub.s32 %s25, %s37
      %s39 = ssub.s32 %s26, %s33
      %s40 = sor.u32 %s38, %s39
      %p41 = scmp.eq.s32.totalorder %s40, 0
      %s43 = sadd.s32 %s42, 1
      %s44 = scalar_select %p41, %s42, %s43
      %p47 = pneg %p41
      %p48 = scmp.eq.s32.totalorder %s18, 31
      %p49 = por %p47, %p48
      %p50 = scmp.ne.s32.totalorder %s42, %s45
      %p51 = scmp.eq.s32.totalorder %s18, 0
      %p52 = por %p50, %p51
      %p53 = scmp.ne.s32.totalorder %s42, %s45
      %p54 = scmp.eq.s32.totalorder %s23, 31
      %p55 = por %p53, %p54
      %p56 = scmp.ne.s32.totalorder %s45, %s46
      %p57 = scmp.eq.s32.totalorder %s23, 0
      %p58 = por %p56, %p57
      %p59 = scmp.ne.s32.totalorder %s45, %s46
      %p60 = scmp.eq.s32.totalorder %s24, 31
      %p61 = por %p59, %p60
      %p63 = scmp.ne.s32.totalorder %s46, %s62
      %p64 = scmp.eq.s32.totalorder %s24, 0
      %p65 = por %p63, %p64
      %s66 = sadd.s32 %s26, 1
      %s67 = sadd.s32 %s33, 1
      %s68 = ssub.s32 %s25, %s37
      %s69 = ssub.s32 %s66, %s67
      %s70 = sor.u32 %s68, %s69
      %p71 = scmp.eq.s32.totalorder %s70, 0
      %s73 = sadd.s32 %s72, 1
      %s74 = scalar_select %p71, %s72, %s73
      %p77 = pneg %p71
      %p78 = scmp.eq.s32.totalorder %s18, 31
      %p79 = por %p77, %p78
      %p80 = scmp.ne.s32.totalorder %s72, %s75
      %p81 = scmp.eq.s32.totalorder %s18, 0
      %p82 = por %p80, %p81
      %p83 = scmp.ne.s32.totalorder %s72, %s75
      %p84 = scmp.eq.s32.totalorder %s23, 31
      %p85 = por %p83, %p84
      %p86 = scmp.ne.s32.totalorder %s75, %s76
      %p87 = scmp.eq.s32.totalorder %s23, 0
      %p88 = por %p86, %p87
      %p89 = scmp.ne.s32.totalorder %s75, %s76
      %p90 = scmp.eq.s32.totalorder %s24, 31
      %p91 = por %p89, %p90
      %p93 = scmp.ne.s32.totalorder %s76, %s92
      %p94 = scmp.eq.s32.totalorder %s24, 0
      %p95 = por %p93, %p94
      %s96 = sadd.s32 %s26, 2
      %s97 = sadd.s32 %s33, 2
      %s98 = ssub.s32 %s25, %s37
      %s99 = ssub.s32 %s96, %s97
      %s100 = sor.u32 %s98, %s99
      %p101 = scmp.eq.s32.totalorder %s100, 0
      %s103 = sadd.s32 %s102, 1
      %s104 = scalar_select %p101, %s102, %s103
      %p107 = pneg %p101
      %p108 = scmp.eq.s32.totalorder %s18, 31
      %p109 = por %p107, %p108
      %p110 = scmp.ne.s32.totalorder %s102, %s105
      %p111 = scmp.eq.s32.totalorder %s18, 0
      %p112 = por %p110, %p111
      %p113 = scmp.ne.s32.totalorder %s102, %s105
      %p114 = scmp.eq.s32.totalorder %s23, 31
      %p115 = por %p113, %p114
      %p116 = scmp.ne.s32.totalorder %s105, %s106
      %p117 = scmp.eq.s32.totalorder %s23, 0
      %p118 = por %p116, %p117
      %p119 = scmp.ne.s32.totalorder %s105, %s106
      %p120 = scmp.eq.s32.totalorder %s24, 31
      %p121 = por %p119, %p120
      %p123 = scmp.ne.s32.totalorder %s106, %s122
      %p124 = scmp.eq.s32.totalorder %s24, 0
      %p125 = por %p123, %p124
      %s127 = sadd.s32 %s126, 1
      %p130 = scmp.eq.s32.totalorder %s18, 31
      %p131 = scmp.ne.s32.totalorder %s126, %s128
      %p132 = scmp.eq.s32.totalorder %s18, 0
      %p133 = por %p131, %p132
      %p134 = scmp.ne.s32.totalorder %s126, %s128
      %p135 = scmp.eq.s32.totalorder %s23, 31
      %p136 = por %p134, %p135
      %p137 = scmp.ne.s32.totalorder %s128, %s129
      %p138 = scmp.eq.s32.totalorder %s23, 0
      %p139 = por %p137, %p138
      %p140 = scmp.ne.s32.totalorder %s128, %s129
      %p141 = scmp.eq.s32.totalorder %s24, 31
      %p142 = por %p140, %p141
      %p144 = scmp.ne.s32.totalorder %s129, %s143
      %p145 = scmp.eq.s32.totalorder %s24, 0
      %p146 = por %p144, %p145
      %s148 = sadd.s32 %s147, 1
      %p151 = scmp.eq.s32.totalorder %s18, 31
      %p152 = scmp.ne.s32.totalorder %s147, %s149
      %p153 = scmp.eq.s32.totalorder %s18, 0
      %p154 = por %p152, %p153
      %p155 = scmp.ne.s32.totalorder %s147, %s149
      %p156 = scmp.eq.s32.totalorder %s23, 31
      %p157 = por %p155, %p156
      %p158 = scmp.ne.s32.totalorder %s149, %s150
      %p159 = scmp.eq.s32.totalorder %s23, 0
      %p160 = por %p158, %p159
      %p161 = scmp.ne.s32.totalorder %s149, %s150
      %p162 = scmp.eq.s32.totalorder %s24, 31
      %p163 = por %p161, %p162
      %p165 = scmp.ne.s32.totalorder %s150, %s164
      %p166 = scmp.eq.s32.totalorder %s24, 0
      %p167 = por %p165, %p166
      %s168 = ssub.s32 %s25, %s37
      %s169 = ssub.s32 %s26, %s33
      %s170 = sor.u32 %s168, %s169
      %p171 = scmp.eq.s32.totalorder %s170, 0
      %s173 = sadd.s32 %s172, 1
      %s174 = scalar_select %p171, %s172, %s173
      %p177 = pneg %p171
      %p178 = scmp.eq.s32.totalorder %s18, 31
      %p179 = por %p177, %p178
      %p180 = scmp.ne.s32.totalorder %s172, %s175
      %p181 = scmp.eq.s32.totalorder %s18, 0
      %p182 = por %p180, %p181
      %p183 = scmp.ne.s32.totalorder %s172, %s175
      %p184 = scmp.eq.s32.totalorder %s23, 31
      %p185 = por %p183, %p184
      %p186 = scmp.ne.s32.totalorder %s175, %s176
      %p187 = scmp.eq.s32.totalorder %s23, 0
      %p188 = por %p186, %p187
      %p189 = scmp.ne.s32.totalorder %s175, %s176
      %p190 = scmp.eq.s32.totalorder %s24, 31
      %p191 = por %p189, %p190
      %p193 = scmp.ne.s32.totalorder %s176, %s192
      %p194 = scmp.eq.s32.totalorder %s24, 0
      %p195 = por %p193, %p194
      %s197 = sadd.s32 %s196, 1
      %p200 = scmp.eq.s32.totalorder %s18, 31
      %p201 = scmp.ne.s32.totalorder %s196, %s198
      %p202 = scmp.eq.s32.totalorder %s18, 0
      %p203 = por %p201, %p202
      %p204 = scmp.ne.s32.totalorder %s196, %s198
      %p205 = scmp.eq.s32.totalorder %s23, 31
      %p206 = por %p204, %p205
      %p207 = scmp.ne.s32.totalorder %s198, %s199
      %p208 = scmp.eq.s32.totalorder %s23, 0
      %p209 = por %p207, %p208
      %p210 = scmp.ne.s32.totalorder %s198, %s199
      %p211 = scmp.eq.s32.totalorder %s24, 31
      %p212 = por %p210, %p211
      %p214 = scmp.ne.s32.totalorder %s199, %s213
      %p215 = scmp.eq.s32.totalorder %s24, 0
      %p216 = por %p214, %p215
      %s218 = sadd.s32 %s217, 1
      %p221 = scmp.eq.s32.totalorder %s18, 31
      %p222 = scmp.ne.s32.totalorder %s217, %s219
      %p223 = scmp.eq.s32.totalorder %s18, 0
      %p224 = por %p222, %p223
      %p225 = scmp.ne.s32.totalorder %s217, %s219
      %p226 = scmp.eq.s32.totalorder %s23, 31
      %p227 = por %p225, %p226
      %p228 = scmp.ne.s32.totalorder %s219, %s220
      %p229 = scmp.eq.s32.totalorder %s23, 0
      %p230 = por %p228, %p229
      %p231 = scmp.ne.s32.totalorder %s219, %s220
      %p232 = scmp.eq.s32.totalorder %s24, 31
      %p233 = por %p231, %p232
      %p235 = scmp.ne.s32.totalorder %s220, %s234
      %p236 = scmp.eq.s32.totalorder %s24, 0
      %p237 = por %p235, %p236
      %p238 = scmp.le.s32.totalorder 1, %s18
      %p239 = scmp.lt.s32.totalorder %s18, 33
      %p240 = pnand %p238, %p239
      %p241 = pneg %p240
      // Predicated region
      $region9: #{tpu_custom_call.1} parent=5 // pred_check
        _
      $region10: #{tpu_custom_call.1} parent=5 // pred_check_branch
        %243 = sbr.rel (%p240) target = $region12
      $region11: #{tpu_custom_call.1} parent=5 // pred_region
        %s244 = ssub.s32 %s18, 1
        // Predicated region
        $region13: #{tpu_custom_call.1} parent=11 // pred_check
          %p245 = pneg %p139
        $region14: #{tpu_custom_call.1} parent=11 // pred_check_branch
          %247 = sbr.rel (%p245) target = $region16
        $region15: #{tpu_custom_call.1} parent=11 // pred_region
          _
        $region16: #{tpu_custom_call.1} parent=11 // pred_fallthru
          _
        // Predicated region
        $region17: #{tpu_custom_call.1} parent=11 // pred_check
          %p248 = pneg %p160
        $region18: #{tpu_custom_call.1} parent=11 // pred_check_branch
          %250 = sbr.rel (%p248) target = $region20
        $region19: #{tpu_custom_call.1} parent=11 // pred_region
          _
        $region20: #{tpu_custom_call.1} parent=11 // pred_fallthru
          _
      $region12: #{tpu_custom_call.1} parent=5 // pred_fallthru
        _
      %p251 = scmp.lt.s32.totalorder %s18, 32
      // Predicated region
      $region21: #{tpu_custom_call.1} parent=5 // pred_check
        %p252 = pneg %p251
      $region22: #{tpu_custom_call.1} parent=5 // pred_check_branch
        %254 = sbr.rel (%p252) target = $region24
      $region23: #{tpu_custom_call.1} parent=5 // pred_region
        // Predicated region
        $region25: #{tpu_custom_call.1} parent=23 // pred_check
          %p255 = pneg %p52
        $region26: #{tpu_custom_call.1} parent=23 // pred_check_branch
          %257 = sbr.rel (%p255) target = $region28
        $region27: #{tpu_custom_call.1} parent=23 // pred_region
          %p258 = scmp.lt.s32.totalorder %s25, 1
          %s259 = scalar_select %p258, %s25, 1
          %p260 = scmp.lt.s32.totalorder %s26, 17
          %s261 = scalar_select %p260, %s26, 17
          %s262 = smul.addr %s261, 3
          %s263 = smul.addr %s259, 54
          %s264 = sadd.s32 %s262, %s263
          %s265 = smul.addr %s264, 4
          %s266 = scalar_lea.vmem %s0, %s265
        $region28: #{tpu_custom_call.1} parent=23 // pred_fallthru
          _
        // Predicated region
        $region29: #{tpu_custom_call.1} parent=23 // pred_check
          %p267 = pneg %p82
        $region30: #{tpu_custom_call.1} parent=23 // pred_check_branch
          %269 = sbr.rel (%p267) target = $region32
        $region31: #{tpu_custom_call.1} parent=23 // pred_region
          %s270 = sadd.s32 %s26, 1
          %p271 = scmp.lt.s32.totalorder %s25, 1
          %s272 = scalar_select %p271, %s25, 1
          %p273 = scmp.lt.s32.totalorder %s270, 17
          %s274 = scalar_select %p273, %s270, 17
          %s275 = smul.addr %s274, 3
          %s276 = smul.addr %s272, 54
          %s277 = sadd.s32 %s275, %s276
          %s278 = smul.addr %s277, 4
          %s279 = scalar_lea.vmem %s1, %s278
          %s280 = sadd.s32 %s26, 1
        $region32: #{tpu_custom_call.1} parent=23 // pred_fallthru
          _
        // Predicated region
        $region33: #{tpu_custom_call.1} parent=23 // pred_check
          %p281 = pneg %p112
        $region34: #{tpu_custom_call.1} parent=23 // pred_check_branch
          %283 = sbr.rel (%p281) target = $region36
        $region35: #{tpu_custom_call.1} parent=23 // pred_region
          %s284 = sadd.s32 %s26, 2
          %p285 = scmp.lt.s32.totalorder %s25, 1
          %s286 = scalar_select %p285, %s25, 1
          %p287 = scmp.lt.s32.totalorder %s284, 17
          %s288 = scalar_select %p287, %s284, 17
          %s289 = smul.addr %s288, 3
          %s290 = smul.addr %s286, 54
          %s291 = sadd.s32 %s289, %s290
          %s292 = smul.addr %s291, 4
          %s293 = scalar_lea.vmem %s2, %s292
          %s294 = sadd.s32 %s26, 2
        $region36: #{tpu_custom_call.1} parent=23 // pred_fallthru
          _
      $region24: #{tpu_custom_call.1} parent=5 // pred_fallthru
        _
      %p295 = scmp.le.s32.totalorder 1, %s18
      %p296 = scmp.lt.s32.totalorder %s18, 33
      %p297 = pnand %p295, %p296
      %p298 = pneg %p297
      // Predicated region
      $region37: #{tpu_custom_call.1} parent=5 // pred_check
        _
      $region38: #{tpu_custom_call.1} parent=5 // pred_check_branch
        %300 = sbr.rel (%p297) target = $region40
      $region39: #{tpu_custom_call.1} parent=5 // pred_region
        %s301 = ssub.s32 %s18, 1
        %p302 = scmp.lt.s32.totalorder %s27, 1
        %s303 = scalar_select %p302, %s27, 1
        %p304 = scmp.lt.s32.totalorder %s28, 17
        %s305 = scalar_select %p304, %s28, 17
        %s306 = smul.addr %s305, 3
        %s307 = smul.addr %s303, 54
        %s308 = sadd.s32 %s306, %s307
        %s309 = smul.addr %s308, 4
        %s310 = scalar_lea.vmem %s0, %s309
        %p311 = pneg %p58
        %p312 = pneg %p55
        %s313 = sadd.s32 %s28, 1
        %p314 = scmp.lt.s32.totalorder %s27, 1
        %s315 = scalar_select %p314, %s27, 1
        %p316 = scmp.lt.s32.totalorder %s313, 17
        %s317 = scalar_select %p316, %s313, 17
        %s318 = smul.addr %s317, 3
        %s319 = smul.addr %s315, 54
        %s320 = sadd.s32 %s318, %s319
        %s321 = smul.addr %s320, 4
        %s322 = scalar_lea.vmem %s1, %s321
        %p323 = pneg %p88
        %p324 = pneg %p85
        %s325 = sadd.s32 %s28, 2
        %p326 = scmp.lt.s32.totalorder %s27, 1
        %s327 = scalar_select %p326, %s27, 1
        %p328 = scmp.lt.s32.totalorder %s325, 17
        %s329 = scalar_select %p328, %s325, 17
        %s330 = smul.addr %s329, 3
        %s331 = smul.addr %s327, 54
        %s332 = sadd.s32 %s330, %s331
        %s333 = smul.addr %s332, 4
        %s334 = scalar_lea.vmem %s2, %s333
        %p335 = pneg %p118
        %p336 = pneg %p115
        %p337 = pneg %p139
        %p338 = pneg %p136
        %p339 = pneg %p160
        %p340 = pneg %p157
        %p341 = pneg %p188
        %p342 = pneg %p185
        %s343 = sand.u32 %s175, 1
        %s344 = scalar_lea.sflag [#allocation3], %s343
        %s345 = sand.u32 %s175, 1
        %s346 = smul.addr %s345, 16
        %s347 = scalar_lea.vmem [#allocation2], %s346
        %p348 = pneg %p209
        %p349 = pneg %p206
        %p350 = pneg %p230
        %p351 = pneg %p227
        %p352 = scmp.lt.s32.totalorder %s27, 1
        %s353 = scalar_select %p352, %s27, 1
        %p354 = scmp.lt.s32.totalorder %s28, 17
        %s355 = scalar_select %p354, %s28, 17
        %s356 = smul.addr %s355, 3
        %s357 = smul.addr %s353, 54
        %s358 = sadd.s32 %s356, %s357
        %s359 = smul.addr %s358, 4
        %s360 = scalar_lea.vmem %s0, %s359
        %s361 = sadd.s32 %s28, 1
        %p362 = scmp.lt.s32.totalorder %s27, 1
        %s363 = scalar_select %p362, %s27, 1
        %p364 = scmp.lt.s32.totalorder %s361, 17
        %s365 = scalar_select %p364, %s361, 17
        %s366 = smul.addr %s365, 3
        %s367 = smul.addr %s363, 54
        %s368 = sadd.s32 %s366, %s367
        %s369 = smul.addr %s368, 4
        %s370 = scalar_lea.vmem %s1, %s369
        %s371 = sadd.s32 %s28, 1
        %s372 = sadd.s32 %s28, 2
        %p373 = scmp.lt.s32.totalorder %s27, 1
        %s374 = scalar_select %p373, %s27, 1
        %p375 = scmp.lt.s32.totalorder %s372, 17
        %s376 = scalar_select %p375, %s372, 17
        %s377 = smul.addr %s376, 3
        %s378 = smul.addr %s374, 54
        %s379 = sadd.s32 %s377, %s378
        %s380 = smul.addr %s379, 4
        %s381 = scalar_lea.vmem %s2, %s380
        %s382 = sadd.s32 %s28, 2
        %p384 = scmp.eq.s32.totalorder %s27, 0
        %p385 = scmp.eq.s32.totalorder %s28, 0
        %p386 = pnand %p384, %p385
        %p387 = pneg %p386
        // Predicated region
        $region41: #{tpu_custom_call.1} parent=39 // pred_check
          _
        $region42: #{tpu_custom_call.1} parent=39 // pred_check_branch
          %389 = sbr.rel (%p386) target = $region44
        $region43: #{tpu_custom_call.1} parent=39 // pred_region
          %390 = vst [vmem:[#allocation4] sm:$0x1] 0.0
          %391 = vst [vmem:[#allocation6] sm:$0x1] 0.0
        $region44: #{tpu_custom_call.1} parent=39 // pred_fallthru
          _
        %v392 = vld [vmem:[%s360] sm:$0xf]
        %v393 = vld [vmem:[%s360 + $0x4] sm:$0xf]
        %v394 = vld [vmem:[%s3] sm:$0x3]
        %v395 = vld [vmem:[%s360 + $0x8] sm:$0x1]
        %s396 = scalar_lea.vmem %s3, 2
        %v397 = vld [vmem:[%s396] sm:$0x3]
        %v401 = vunpack.c.l.b16 %v392
        %v402 = vunpack.c.l.b16 %v393
        %v403 = vunpack.c.l.b16 %v395
        %v404 = vpack.c.b16 %v402, %v401
        %v405 = vpack.c.b16 %v403, %v403
        %vm406 = vsmask.f32 7424
        %v408 = vshrl.u32 %v404, 16
        %v410 = vshll.u32 %v404, 16
        %v412 = vrot.slane %v410, 1
        %v413 = vor.u32 %v408, %v412
        %v415 = vshll.u32 %v405, 16
        %v417 = vrot.slane %v415, 1
        %v418 = vsel %vm406, %v413, %v417
        %vm419 = vcmask 31744
        %v421 = vsel %vm419, %v418, 0
        %vm423 = vcmask 1041408
        %v425 = vsel %vm423, %v397, 0
        %427 = vmatprep.subr.bf16.mxu0 0
        %428 = vmatpush1.bf16.msra.mxu0 %v425
        %429 = vmatprep.subr.bf16.mxu0 0
        %430 = vmatpush1.bf16.msra.mxu0 0
        %431 = vmatprep.subr.bf16.mxu0 0
        %432 = vmatpush1.bf16.msra.mxu0 0
        %433 = vmatprep.subr.bf16.mxu0 0
        %434 = vmatpush1.bf16.msra.mxu0 0
        %435 = vmatprep.subr.bf16.mxu0 0
        %436 = vmatpush1.bf16.msra.mxu0 0
        %437 = vmatprep.subr.bf16.mxu0 0
        %438 = vmatpush1.bf16.msra.mxu0 0
        %439 = vmatprep.subr.bf16.mxu0 0
        %440 = vmatpush1.bf16.msra.mxu0 0
        %441 = vmatprep.subr.bf16.mxu0 0
        %442 = vmatpush1.bf16.msra.mxu0 0
        %443 = vmatprep.subr.bf16.mxu0 0
        %444 = vmatpush1.bf16.msra.mxu0 0
        %445 = vmatprep.subr.bf16.mxu0 0
        %446 = vmatpush1.bf16.msra.mxu0 0
        %447 = vmatprep.subr.bf16.mxu0 0
        %448 = vmatpush1.bf16.msra.mxu0 0
        %449 = vmatprep.subr.bf16.mxu0 0
        %450 = vmatpush1.bf16.msra.mxu0 0
        %451 = vmatprep.subr.bf16.mxu0 0
        %452 = vmatpush1.bf16.msra.mxu0 0
        %453 = vmatprep.subr.bf16.mxu0 0
        %454 = vmatpush1.bf16.msra.mxu0 0
        %455 = vmatprep.subr.bf16.mxu0 0
        %456 = vmatpush1.bf16.msra.mxu0 0
        %457 = vmatprep.subr.bf16.mxu0 0
        %458 = vmatpush1.bf16.msra.mxu0 0
        %459 = vmatprep.mubr.bf16.mxu0 0
        %460 = vmatmul.mubr.bf16.gmra.mrb[0].mxu0 %v421
        %v461 = vpop.f32.mrb[0].mxu0
        %v462 = vadd.f32 0.0, %v461
        %v463 = vpop.f32.mrb[0].mxu0
        %v464 = vpop.f32.mrb[0].mxu0
        %v465 = vadd.f32 0.0, %v464
        %v466 = vpop.f32.mrb[0].mxu0
        %467 = vdwg.mxu0
        %v468 = vsel %vm419, %v404, 0
        %v471 = vsel %vm423, %v394, 0
        %473 = vmatprep.subr.bf16.mxu0 0
        %474 = vmatpush1.bf16.msra.mxu0 %v471
        %475 = vmatprep.subr.bf16.mxu0 0
        %476 = vmatpush1.bf16.msra.mxu0 0
        %477 = vmatprep.subr.bf16.mxu0 0
        %478 = vmatpush1.bf16.msra.mxu0 0
        %479 = vmatprep.subr.bf16.mxu0 0
        %480 = vmatpush1.bf16.msra.mxu0 0
        %481 = vmatprep.subr.bf16.mxu0 0
        %482 = vmatpush1.bf16.msra.mxu0 0
        %483 = vmatprep.subr.bf16.mxu0 0
        %484 = vmatpush1.bf16.msra.mxu0 0
        %485 = vmatprep.subr.bf16.mxu0 0
        %486 = vmatpush1.bf16.msra.mxu0 0
        %487 = vmatprep.subr.bf16.mxu0 0
        %488 = vmatpush1.bf16.msra.mxu0 0
        %489 = vmatprep.subr.bf16.mxu0 0
        %490 = vmatpush1.bf16.msra.mxu0 0
        %491 = vmatprep.subr.bf16.mxu0 0
        %492 = vmatpush1.bf16.msra.mxu0 0
        %493 = vmatprep.subr.bf16.mxu0 0
        %494 = vmatpush1.bf16.msra.mxu0 0
        %495 = vmatprep.subr.bf16.mxu0 0
        %496 = vmatpush1.bf16.msra.mxu0 0
        %497 = vmatprep.subr.bf16.mxu0 0
        %498 = vmatpush1.bf16.msra.mxu0 0
        %499 = vmatprep.subr.bf16.mxu0 0
        %500 = vmatpush1.bf16.msra.mxu0 0
        %501 = vmatprep.subr.bf16.mxu0 0
        %502 = vmatpush1.bf16.msra.mxu0 0
        %503 = vmatprep.subr.bf16.mxu0 0
        %504 = vmatpush1.bf16.msra.mxu0 0
        %505 = vmatprep.mubr.bf16.mxu0 0
        %506 = vmatmul.mubr.bf16.gmra.mrb[0].mxu0 %v468
        %v507 = vpop.f32.mrb[0].mxu0
        %v508 = vadd.f32 %v462, %v507
        %v509 = vpop.f32.mrb[0].mxu0
        %v510 = vpop.f32.mrb[0].mxu0
        %v511 = vadd.f32 %v465, %v510
        %v512 = vpop.f32.mrb[0].mxu0
        %513 = vdwg.mxu0
        %v514 = vld [vmem:[%s360] sm:$0xe]
        %s515 = scalar_lea.vmem %s3, 4
        %v516 = vld [vmem:[%s515] sm:$0x3]
        %v518 = vunpack.c.l.b16 %v514
        %v519 = vpack.c.b16 %v402, %v518
        %vm520 = vcmask 1046528
        %v521 = vrot.slane %v519, 1
        %v522 = vrot.slane %v405, 1
        %v523 = vsel %vm520, %v521, %v522
        %v525 = vsel %vm419, %v523, 0
        %v528 = vsel %vm423, %v516, 0
        %530 = vmatprep.subr.bf16.mxu0 0
        %531 = vmatpush1.bf16.msra.mxu0 %v528
        %532 = vmatprep.subr.bf16.mxu0 0
        %533 = vmatpush1.bf16.msra.mxu0 0
        %534 = vmatprep.subr.bf16.mxu0 0
        %535 = vmatpush1.bf16.msra.mxu0 0
        %536 = vmatprep.subr.bf16.mxu0 0
        %537 = vmatpush1.bf16.msra.mxu0 0
        %538 = vmatprep.subr.bf16.mxu0 0
        %539 = vmatpush1.bf16.msra.mxu0 0
        %540 = vmatprep.subr.bf16.mxu0 0
        %541 = vmatpush1.bf16.msra.mxu0 0
        %542 = vmatprep.subr.bf16.mxu0 0
        %543 = vmatpush1.bf16.msra.mxu0 0
        %544 = vmatprep.subr.bf16.mxu0 0
        %545 = vmatpush1.bf16.msra.mxu0 0
        %546 = vmatprep.subr.bf16.mxu0 0
        %547 = vmatpush1.bf16.msra.mxu0 0
        %548 = vmatprep.subr.bf16.mxu0 0
        %549 = vmatpush1.bf16.msra.mxu0 0
        %550 = vmatprep.subr.bf16.mxu0 0
        %551 = vmatpush1.bf16.msra.mxu0 0
        %552 = vmatprep.subr.bf16.mxu0 0
        %553 = vmatpush1.bf16.msra.mxu0 0
        %554 = vmatprep.subr.bf16.mxu0 0
        %555 = vmatpush1.bf16.msra.mxu0 0
        %556 = vmatprep.subr.bf16.mxu0 0
        %557 = vmatpush1.bf16.msra.mxu0 0
        %558 = vmatprep.subr.bf16.mxu0 0
        %559 = vmatpush1.bf16.msra.mxu0 0
        %560 = vmatprep.subr.bf16.mxu0 0
        %561 = vmatpush1.bf16.msra.mxu0 0
        %562 = vmatprep.mubr.bf16.mxu0 0
        %563 = vmatmul.mubr.bf16.gmra.mrb[0].mxu0 %v525
        %v564 = vpop.f32.mrb[0].mxu0
        %v565 = vadd.f32 0.0, %v564
        %v566 = vpop.f32.mrb[0].mxu0
        %v567 = vpop.f32.mrb[0].mxu0
        %v568 = vadd.f32 0.0, %v567
        %v569 = vpop.f32.mrb[0].mxu0
        %570 = vdwg.mxu0
        %v571 = vadd.f32 %v508, %v565
        %v572 = vadd.f32 %v511, %v568
        %v573 = vld [vmem:[%s370] sm:$0xf]
        %v574 = vld [vmem:[%s370 + $0x4] sm:$0xf]
        %s575 = scalar_lea.vmem %s3, 6
        %v576 = vld [vmem:[%s575] sm:$0x3]
        %v579 = vunpack.c.l.b16 %v573
        %v580 = vunpack.c.l.b16 %v574
        %v581 = vpack.c.b16 %v580, %v579
        %v583 = vsel %vm419, %v581, 0
        %v586 = vsel %vm423, %v576, 0
        %588 = vmatprep.subr.bf16.mxu0 0
        %589 = vmatpush1.bf16.msra.mxu0 %v586
        %590 = vmatprep.subr.bf16.mxu0 0
        %591 = vmatpush1.bf16.msra.mxu0 0
        %592 = vmatprep.subr.bf16.mxu0 0
        %593 = vmatpush1.bf16.msra.mxu0 0
        %594 = vmatprep.subr.bf16.mxu0 0
        %595 = vmatpush1.bf16.msra.mxu0 0
        %596 = vmatprep.subr.bf16.mxu0 0
        %597 = vmatpush1.bf16.msra.mxu0 0
        %598 = vmatprep.subr.bf16.mxu0 0
        %599 = vmatpush1.bf16.msra.mxu0 0
        %600 = vmatprep.subr.bf16.mxu0 0
        %601 = vmatpush1.bf16.msra.mxu0 0
        %602 = vmatprep.subr.bf16.mxu0 0
        %603 = vmatpush1.bf16.msra.mxu0 0
        %604 = vmatprep.subr.bf16.mxu0 0
        %605 = vmatpush1.bf16.msra.mxu0 0
        %606 = vmatprep.subr.bf16.mxu0 0
        %607 = vmatpush1.bf16.msra.mxu0 0
        %608 = vmatprep.subr.bf16.mxu0 0
        %609 = vmatpush1.bf16.msra.mxu0 0
        %610 = vmatprep.subr.bf16.mxu0 0
        %611 = vmatpush1.bf16.msra.mxu0 0
        %612 = vmatprep.subr.bf16.mxu0 0
        %613 = vmatpush1.bf16.msra.mxu0 0
        %614 = vmatprep.subr.bf16.mxu0 0
        %615 = vmatpush1.bf16.msra.mxu0 0
        %616 = vmatprep.subr.bf16.mxu0 0
        %617 = vmatpush1.bf16.msra.mxu0 0
        %618 = vmatprep.subr.bf16.mxu0 0
        %619 = vmatpush1.bf16.msra.mxu0 0
        %620 = vmatprep.mubr.bf16.mxu0 0
        %621 = vmatmul.mubr.bf16.gmra.mrb[0].mxu0 %v583
        %v622 = vpop.f32.mrb[0].mxu0
        %v623 = vadd.f32 0.0, %v622
        %v624 = vpop.f32.mrb[0].mxu0
        %v625 = vpop.f32.mrb[0].mxu0
        %v626 = vadd.f32 0.0, %v625
        %v627 = vpop.f32.mrb[0].mxu0
        %628 = vdwg.mxu0
        %v629 = vadd.f32 %v571, %v623
        %v630 = vadd.f32 %v572, %v626
        %v631 = vld [vmem:[%s370] sm:$0xf]
        %v632 = vld [vmem:[%s370 + $0x4] sm:$0xf]
        %v633 = vld [vmem:[%s370 + $0x8] sm:$0x1]
        %s634 = scalar_lea.vmem %s3, 8
        %v635 = vld [vmem:[%s634] sm:$0x3]
        %v639 = vunpack.c.l.b16 %v631
        %v640 = vunpack.c.l.b16 %v632
        %v641 = vunpack.c.l.b16 %v633
        %v642 = vpack.c.b16 %v640, %v639
        %v643 = vpack.c.b16 %v641, %v641
        %v645 = vshrl.u32 %v642, 16
        %v647 = vshll.u32 %v642, 16
        %v649 = vrot.slane %v647, 1
        %v650 = vor.u32 %v645, %v649
        %v652 = vshll.u32 %v643, 16
        %v654 = vrot.slane %v652, 1
        %v655 = vsel %vm406, %v650, %v654
        %v657 = vsel %vm419, %v655, 0
        %v660 = vsel %vm423, %v635, 0
        %662 = vmatprep.subr.bf16.mxu0 0
        %663 = vmatpush1.bf16.msra.mxu0 %v660
        %664 = vmatprep.subr.bf16.mxu0 0
        %665 = vmatpush1.bf16.msra.mxu0 0
        %666 = vmatprep.subr.bf16.mxu0 0
        %667 = vmatpush1.bf16.msra.mxu0 0
        %668 = vmatprep.subr.bf16.mxu0 0
        %669 = vmatpush1.bf16.msra.mxu0 0
        %670 = vmatprep.subr.bf16.mxu0 0
        %671 = vmatpush1.bf16.msra.mxu0 0
        %672 = vmatprep.subr.bf16.mxu0 0
        %673 = vmatpush1.bf16.msra.mxu0 0
        %674 = vmatprep.subr.bf16.mxu0 0
        %675 = vmatpush1.bf16.msra.mxu0 0
        %676 = vmatprep.subr.bf16.mxu0 0
        %677 = vmatpush1.bf16.msra.mxu0 0
        %678 = vmatprep.subr.bf16.mxu0 0
        %679 = vmatpush1.bf16.msra.mxu0 0
        %680 = vmatprep.subr.bf16.mxu0 0
        %681 = vmatpush1.bf16.msra.mxu0 0
        %682 = vmatprep.subr.bf16.mxu0 0
        %683 = vmatpush1.bf16.msra.mxu0 0
        %684 = vmatprep.subr.bf16.mxu0 0
        %685 = vmatpush1.bf16.msra.mxu0 0
        %686 = vmatprep.subr.bf16.mxu0 0
        %687 = vmatpush1.bf16.msra.mxu0 0
        %688 = vmatprep.subr.bf16.mxu0 0
        %689 = vmatpush1.bf16.msra.mxu0 0
        %690 = vmatprep.subr.bf16.mxu0 0
        %691 = vmatpush1.bf16.msra.mxu0 0
        %692 = vmatprep.subr.bf16.mxu0 0
        %693 = vmatpush1.bf16.msra.mxu0 0
        %694 = vmatprep.mubr.bf16.mxu0 0
        %695 = vmatmul.mubr.bf16.gmra.mrb[0].mxu0 %v657
        %v696 = vpop.f32.mrb[0].mxu0
        %v697 = vadd.f32 0.0, %v696
        %v698 = vpop.f32.mrb[0].mxu0
        %v699 = vpop.f32.mrb[0].mxu0
        %v700 = vadd.f32 0.0, %v699
        %v701 = vpop.f32.mrb[0].mxu0
        %702 = vdwg.mxu0
        %v703 = vadd.f32 %v629, %v697
        %v704 = vadd.f32 %v630, %v700
        %v705 = vld [vmem:[%s370] sm:$0xe]
        %s706 = scalar_lea.vmem %s3, 10
        %v707 = vld [vmem:[%s706] sm:$0x3]
        %v709 = vunpack.c.l.b16 %v705
        %v710 = vpack.c.b16 %v640, %v709
        %v711 = vrot.slane %v710, 1
        %v712 = vrot.slane %v643, 1
        %v713 = vsel %vm520, %v711, %v712
        %v715 = vsel %vm419, %v713, 0
        %v718 = vsel %vm423, %v707, 0
        %720 = vmatprep.subr.bf16.mxu0 0
        %721 = vmatpush1.bf16.msra.mxu0 %v718
        %722 = vmatprep.subr.bf16.mxu0 0
        %723 = vmatpush1.bf16.msra.mxu0 0
        %724 = vmatprep.subr.bf16.mxu0 0
        %725 = vmatpush1.bf16.msra.mxu0 0
        %726 = vmatprep.subr.bf16.mxu0 0
        %727 = vmatpush1.bf16.msra.mxu0 0
        %728 = vmatprep.subr.bf16.mxu0 0
        %729 = vmatpush1.bf16.msra.mxu0 0
        %730 = vmatprep.subr.bf16.mxu0 0
        %731 = vmatpush1.bf16.msra.mxu0 0
        %732 = vmatprep.subr.bf16.mxu0 0
        %733 = vmatpush1.bf16.msra.mxu0 0
        %734 = vmatprep.subr.bf16.mxu0 0
        %735 = vmatpush1.bf16.msra.mxu0 0
        %736 = vmatprep.subr.bf16.mxu0 0
        %737 = vmatpush1.bf16.msra.mxu0 0
        %738 = vmatprep.subr.bf16.mxu0 0
        %739 = vmatpush1.bf16.msra.mxu0 0
        %740 = vmatprep.subr.bf16.mxu0 0
        %741 = vmatpush1.bf16.msra.mxu0 0
        %742 = vmatprep.subr.bf16.mxu0 0
        %743 = vmatpush1.bf16.msra.mxu0 0
        %744 = vmatprep.subr.bf16.mxu0 0
        %745 = vmatpush1.bf16.msra.mxu0 0
        %746 = vmatprep.subr.bf16.mxu0 0
        %747 = vmatpush1.bf16.msra.mxu0 0
        %748 = vmatprep.subr.bf16.mxu0 0
        %749 = vmatpush1.bf16.msra.mxu0 0
        %750 = vmatprep.subr.bf16.mxu0 0
        %751 = vmatpush1.bf16.msra.mxu0 0
        %752 = vmatprep.mubr.bf16.mxu0 0
        %753 = vmatmul.mubr.bf16.gmra.mrb[0].mxu0 %v715
        %v754 = vpop.f32.mrb[0].mxu0
        %v755 = vadd.f32 0.0, %v754
        %v756 = vpop.f32.mrb[0].mxu0
        %v757 = vpop.f32.mrb[0].mxu0
        %v758 = vadd.f32 0.0, %v757
        %v759 = vpop.f32.mrb[0].mxu0
        %760 = vdwg.mxu0
        %v761 = vadd.f32 %v703, %v755
        %v762 = vadd.f32 %v704, %v758
        %v763 = vld [vmem:[%s381] sm:$0xf]
        %v764 = vld [vmem:[%s381 + $0x4] sm:$0xf]
        %s765 = scalar_lea.vmem %s3, 12
        %v766 = vld [vmem:[%s765] sm:$0x3]
        %v769 = vunpack.c.l.b16 %v763
        %v770 = vunpack.c.l.b16 %v764
        %v771 = vpack.c.b16 %v770, %v769
        %v773 = vsel %vm419, %v771, 0
        %v776 = vsel %vm423, %v766, 0
        %778 = vmatprep.subr.bf16.mxu0 0
        %779 = vmatpush1.bf16.msra.mxu0 %v776
        %780 = vmatprep.subr.bf16.mxu0 0
        %781 = vmatpush1.bf16.msra.mxu0 0
        %782 = vmatprep.subr.bf16.mxu0 0
        %783 = vmatpush1.bf16.msra.mxu0 0
        %784 = vmatprep.subr.bf16.mxu0 0
        %785 = vmatpush1.bf16.msra.mxu0 0
        %786 = vmatprep.subr.bf16.mxu0 0
        %787 = vmatpush1.bf16.msra.mxu0 0
        %788 = vmatprep.subr.bf16.mxu0 0
        %789 = vmatpush1.bf16.msra.mxu0 0
        %790 = vmatprep.subr.bf16.mxu0 0
        %791 = vmatpush1.bf16.msra.mxu0 0
        %792 = vmatprep.subr.bf16.mxu0 0
        %793 = vmatpush1.bf16.msra.mxu0 0
        %794 = vmatprep.subr.bf16.mxu0 0
        %795 = vmatpush1.bf16.msra.mxu0 0
        %796 = vmatprep.subr.bf16.mxu0 0
        %797 = vmatpush1.bf16.msra.mxu0 0
        %798 = vmatprep.subr.bf16.mxu0 0
        %799 = vmatpush1.bf16.msra.mxu0 0
        %800 = vmatprep.subr.bf16.mxu0 0
        %801 = vmatpush1.bf16.msra.mxu0 0
        %802 = vmatprep.subr.bf16.mxu0 0
        %803 = vmatpush1.bf16.msra.mxu0 0
        %804 = vmatprep.subr.bf16.mxu0 0
        %805 = vmatpush1.bf16.msra.mxu0 0
        %806 = vmatprep.subr.bf16.mxu0 0
        %807 = vmatpush1.bf16.msra.mxu0 0
        %808 = vmatprep.subr.bf16.mxu0 0
        %809 = vmatpush1.bf16.msra.mxu0 0
        %810 = vmatprep.mubr.bf16.mxu0 0
        %811 = vmatmul.mubr.bf16.gmra.mrb[0].mxu0 %v773
        %v812 = vpop.f32.mrb[0].mxu0
        %v813 = vadd.f32 0.0, %v812
        %v814 = vpop.f32.mrb[0].mxu0
        %v815 = vpop.f32.mrb[0].mxu0
        %v816 = vadd.f32 0.0, %v815
        %v817 = vpop.f32.mrb[0].mxu0
        %818 = vdwg.mxu0
        %v819 = vadd.f32 %v761, %v813
        %v820 = vadd.f32 %v762, %v816
        %v821 = vld [vmem:[%s381] sm:$0xf]
        %v822 = vld [vmem:[%s381 + $0x4] sm:$0xf]
        %v823 = vld [vmem:[%s381 + $0x8] sm:$0x1]
        %s824 = scalar_lea.vmem %s3, 14
        %v825 = vld [vmem:[%s824] sm:$0x3]
        %v829 = vunpack.c.l.b16 %v821
        %v830 = vunpack.c.l.b16 %v822
        %v831 = vunpack.c.l.b16 %v823
        %v832 = vpack.c.b16 %v830, %v829
        %v833 = vpack.c.b16 %v831, %v831
        %v835 = vshrl.u32 %v832, 16
        %v837 = vshll.u32 %v832, 16
        %v839 = vrot.slane %v837, 1
        %v840 = vor.u32 %v835, %v839
        %v842 = vshll.u32 %v833, 16
        %v844 = vrot.slane %v842, 1
        %v845 = vsel %vm406, %v840, %v844
        %v847 = vsel %vm419, %v845, 0
        %v850 = vsel %vm423, %v825, 0
        %852 = vmatprep.subr.bf16.mxu0 0
        %853 = vmatpush1.bf16.msra.mxu0 %v850
        %854 = vmatprep.subr.bf16.mxu0 0
        %855 = vmatpush1.bf16.msra.mxu0 0
        %856 = vmatprep.subr.bf16.mxu0 0
        %857 = vmatpush1.bf16.msra.mxu0 0
        %858 = vmatprep.subr.bf16.mxu0 0
        %859 = vmatpush1.bf16.msra.mxu0 0
        %860 = vmatprep.subr.bf16.mxu0 0
        %861 = vmatpush1.bf16.msra.mxu0 0
        %862 = vmatprep.subr.bf16.mxu0 0
        %863 = vmatpush1.bf16.msra.mxu0 0
        %864 = vmatprep.subr.bf16.mxu0 0
        %865 = vmatpush1.bf16.msra.mxu0 0
        %866 = vmatprep.subr.bf16.mxu0 0
        %867 = vmatpush1.bf16.msra.mxu0 0
        %868 = vmatprep.subr.bf16.mxu0 0
        %869 = vmatpush1.bf16.msra.mxu0 0
        %870 = vmatprep.subr.bf16.mxu0 0
        %871 = vmatpush1.bf16.msra.mxu0 0
        %872 = vmatprep.subr.bf16.mxu0 0
        %873 = vmatpush1.bf16.msra.mxu0 0
        %874 = vmatprep.subr.bf16.mxu0 0
        %875 = vmatpush1.bf16.msra.mxu0 0
        %876 = vmatprep.subr.bf16.mxu0 0
        %877 = vmatpush1.bf16.msra.mxu0 0
        %878 = vmatprep.subr.bf16.mxu0 0
        %879 = vmatpush1.bf16.msra.mxu0 0
        %880 = vmatprep.subr.bf16.mxu0 0
        %881 = vmatpush1.bf16.msra.mxu0 0
        %882 = vmatprep.subr.bf16.mxu0 0
        %883 = vmatpush1.bf16.msra.mxu0 0
        %884 = vmatprep.mubr.bf16.mxu0 0
        %885 = vmatmul.mubr.bf16.gmra.mrb[0].mxu0 %v847
        %v886 = vpop.f32.mrb[0].mxu0
        %v887 = vadd.f32 0.0, %v886
        %v888 = vpop.f32.mrb[0].mxu0
        %v889 = vpop.f32.mrb[0].mxu0
        %v890 = vadd.f32 0.0, %v889
        %v891 = vpop.f32.mrb[0].mxu0
        %892 = vdwg.mxu0
        %v893 = vadd.f32 %v819, %v887
        %v894 = vadd.f32 %v820, %v890
        %v895 = vld [vmem:[%s381] sm:$0xe]
        %s896 = scalar_lea.vmem %s3, 16
        %v897 = vld [vmem:[%s896] sm:$0x3]
        %v899 = vunpack.c.l.b16 %v895
        %v900 = vpack.c.b16 %v830, %v899
        %v901 = vrot.slane %v900, 1
        %v902 = vrot.slane %v833, 1
        %v903 = vsel %vm520, %v901, %v902
        %v905 = vsel %vm419, %v903, 0
        %v908 = vsel %vm423, %v897, 0
        %910 = vmatprep.subr.bf16.mxu0 0
        %911 = vmatpush1.bf16.msra.mxu0 %v908
        %912 = vmatprep.subr.bf16.mxu0 0
        %913 = vmatpush1.bf16.msra.mxu0 0
        %914 = vmatprep.subr.bf16.mxu0 0
        %915 = vmatpush1.bf16.msra.mxu0 0
        %916 = vmatprep.subr.bf16.mxu0 0
        %917 = vmatpush1.bf16.msra.mxu0 0
        %918 = vmatprep.subr.bf16.mxu0 0
        %919 = vmatpush1.bf16.msra.mxu0 0
        %920 = vmatprep.subr.bf16.mxu0 0
        %921 = vmatpush1.bf16.msra.mxu0 0
        %922 = vmatprep.subr.bf16.mxu0 0
        %923 = vmatpush1.bf16.msra.mxu0 0
        %924 = vmatprep.subr.bf16.mxu0 0
        %925 = vmatpush1.bf16.msra.mxu0 0
        %926 = vmatprep.subr.bf16.mxu0 0
        %927 = vmatpush1.bf16.msra.mxu0 0
        %928 = vmatprep.subr.bf16.mxu0 0
        %929 = vmatpush1.bf16.msra.mxu0 0
        %930 = vmatprep.subr.bf16.mxu0 0
        %931 = vmatpush1.bf16.msra.mxu0 0
        %932 = vmatprep.subr.bf16.mxu0 0
        %933 = vmatpush1.bf16.msra.mxu0 0
        %934 = vmatprep.subr.bf16.mxu0 0
        %935 = vmatpush1.bf16.msra.mxu0 0
        %936 = vmatprep.subr.bf16.mxu0 0
        %937 = vmatpush1.bf16.msra.mxu0 0
        %938 = vmatprep.subr.bf16.mxu0 0
        %939 = vmatpush1.bf16.msra.mxu0 0
        %940 = vmatprep.subr.bf16.mxu0 0
        %941 = vmatpush1.bf16.msra.mxu0 0
        %942 = vmatprep.mubr.bf16.mxu0 0
        %943 = vmatmul.mubr.bf16.gmra.mrb[0].mxu0 %v905
        %v944 = vpop.f32.mrb[0].mxu0
        %v945 = vadd.f32 0.0, %v944
        %v946 = vpop.f32.mrb[0].mxu0
        %v947 = vpop.f32.mrb[0].mxu0
        %v948 = vadd.f32 0.0, %v947
        %v949 = vpop.f32.mrb[0].mxu0
        %950 = vdwg.mxu0
        %v951 = vadd.f32 %v893, %v945
        %v952 = vadd.f32 %v894, %v948
        %v953 = vld [vmem:[%s4] sm:$0x1]
        %v955 = vlaneseq
        %v956 = vshrl.u32 %v955, 7
        %v957 = vsub.s32 0, %v956
        %v958 = vrot.slane %v953, %v957
        %v960 = vadd.f32 %v951, %v958
        %v961 = vadd.f32 %v952, %v958
        %962 = vst [vmem:[%s347] sm:$0xff] %v960
        %963 = vst [vmem:[%s347 + $0x8] sm:$0xff] %v961
        %v964 = vld [vmem:[#allocation4] sm:$0x1]
        %v965 = vadd.f32 %v960, %v961
        %v966 = vrot.slane %v965, 4
        %v967 = vadd.f32 %v965, %v966
        %v968 = vrot.slane %v967, 2
        %v969 = vadd.f32 %v967, %v968
        %v970 = vrot.slane %v969, 1
        %v971 = vadd.f32 %v969, %v970
        %v972 = vadd.f32 %v964, %v971
        %973 = vst [vmem:[#allocation4] sm:$0x1] %v972
        %v974 = vld [vmem:[#allocation6] sm:$0x1]
        %v975 = vmul.f32 %v960, %v960
        %v976 = vmul.f32 %v961, %v961
        %v977 = vadd.f32 %v975, %v976
        %v978 = vrot.slane %v977, 4
        %v979 = vadd.f32 %v977, %v978
        %v980 = vrot.slane %v979, 2
        %v981 = vadd.f32 %v979, %v980
        %v982 = vrot.slane %v981, 1
        %v983 = vadd.f32 %v981, %v982
        %v984 = vadd.f32 %v974, %v983
        %985 = vst [vmem:[#allocation6] sm:$0x1] %v984
        %s986 = sand.u32 %s175, 1
        %s987 = scalar_lea.sflag [#allocation3], %s986
        %s988 = sand.u32 %s175, 1
        %s989 = smul.addr %s988, 16
        %s990 = scalar_lea.vmem [#allocation2], %s989
        // Predicated region
        $region45: #{tpu_custom_call.1} parent=39 // pred_check
          %p991 = pneg %p185
        $region46: #{tpu_custom_call.1} parent=39 // pred_check_branch
          %993 = sbr.rel (%p991) target = $region48
        $region47: #{tpu_custom_call.1} parent=39 // pred_region
          %s995 = ssub.s32 256, 256
          %996 = vsyncadd %s987, %s995
          %s997 = smul.addr %s28, 2
          %s998 = smul.addr %s27, 32
          %s999 = sadd.s32 %s997, %s998
          %s1000 = smul.addr %s999, 128
          %s1001 = scalar_lea.hbm %s5, %s1000
          %s1002 = sshll.u32 %s990, 4
          %s1003 = int_to_ptr.vmem [resolvable:$true] %s1002
          %1008 = dma.vmem_to_hbm [thread:$0]  %s1003, 256, %s1001, %s987, 128, 128, 8
        $region48: #{tpu_custom_call.1} parent=39 // pred_fallthru
          _
        // Predicated region
        $region49: #{tpu_custom_call.1} parent=39 // pred_check
          %p1009 = pneg %p206
        $region50: #{tpu_custom_call.1} parent=39 // pred_check_branch
          %1011 = sbr.rel (%p1009) target = $region52
        $region51: #{tpu_custom_call.1} parent=39 // pred_region
          %s1013 = ssub.s32 16, 16
          %1014 = vsyncadd [#allocation5], %s1013
          %s1016 = sshll.u32 [#allocation4], 4
          %s1017 = int_to_ptr.vmem [resolvable:$true] %s1016
          %1019 = dma.vmem_to_hbm [thread:$0]  %s1017, 16, %s6, [#allocation5]
        $region52: #{tpu_custom_call.1} parent=39 // pred_fallthru
          _
        // Predicated region
        $region53: #{tpu_custom_call.1} parent=39 // pred_check
          %p1020 = pneg %p227
        $region54: #{tpu_custom_call.1} parent=39 // pred_check_branch
          %1022 = sbr.rel (%p1020) target = $region56
        $region55: #{tpu_custom_call.1} parent=39 // pred_region
          %s1024 = ssub.s32 16, 16
          %1025 = vsyncadd [#allocation5], %s1024
          %s1027 = sshll.u32 [#allocation6], 4
          %s1028 = int_to_ptr.vmem [resolvable:$true] %s1027
          %1030 = dma.vmem_to_hbm [thread:$0]  %s1028, 16, %s7, [#allocation5]
        $region56: #{tpu_custom_call.1} parent=39 // pred_fallthru
          _
        // Predicated region
        $region57: #{tpu_custom_call.1} parent=39 // pred_check
          %p1031 = pneg %p206
        $region58: #{tpu_custom_call.1} parent=39 // pred_check_branch
          %1033 = sbr.rel (%p1031) target = $region60
        $region59: #{tpu_custom_call.1} parent=39 // pred_region
          %1034 = dma.done [#allocation5], 16
        $region60: #{tpu_custom_call.1} parent=39 // pred_fallthru
          _
        // Predicated region
        $region61: #{tpu_custom_call.1} parent=39 // pred_check
          %p1035 = pneg %p227
        $region62: #{tpu_custom_call.1} parent=39 // pred_check_branch
          %1037 = sbr.rel (%p1035) target = $region64
        $region63: #{tpu_custom_call.1} parent=39 // pred_region
          %1038 = dma.done [#allocation5], 16
        $region64: #{tpu_custom_call.1} parent=39 // pred_fallthru
          _
      $region40: #{tpu_custom_call.1} parent=5 // pred_fallthru
        _
      %p1039 = scmp.le.s32.totalorder 2, %s18
      // Predicated region
      $region65: #{tpu_custom_call.1} parent=5 // pred_check
        %p1040 = pneg %p1039
      $region66: #{tpu_custom_call.1} parent=5 // pred_check_branch
        %1042 = sbr.rel (%p1040) target = $region68
      $region67: #{tpu_custom_call.1} parent=5 // pred_region
        %s1043 = ssub.s32 %s18, 2
        // Predicated region
        $region69: #{tpu_custom_call.1} parent=67 // pred_check
          %p1044 = pneg %p191
        $region70: #{tpu_custom_call.1} parent=67 // pred_check_branch
          %1046 = sbr.rel (%p1044) target = $region72
        $region71: #{tpu_custom_call.1} parent=67 // pred_region
          %s1047 = sand.u32 %s176, 1
          %s1048 = scalar_lea.sflag [#allocation3], %s1047
          %s1049 = sand.u32 %s176, 1
          %s1050 = smul.addr %s1049, 16
          %s1051 = scalar_lea.vmem [#allocation2], %s1050
          %1052 = dma.done %s1048, 256
        $region72: #{tpu_custom_call.1} parent=67 // pred_fallthru
          _
      $region68: #{tpu_custom_call.1} parent=5 // pred_fallthru
        _
    $region6: #{tpu_custom_call.1} parent=1 // loop_footer
      %s22 = sadd.s32 1, %s18
    $region7: #{tpu_custom_call.1} parent=1 // loop_footer_branch
      %17 = sbr.rel target = $region3
    $region8: #{tpu_custom_call.1} parent=1 // loop_exit
      _
    %1053 = vsyncpa [#allocation3], 1
    %s1054 = scalar_lea.sflag [#allocation3], 1
    %1055 = vsyncpa %s1054, 1
    %1056 = vsyncpa [#allocation5], 1

</llo_original>
